<compile_context>
chip_gen: v6e
topology: v6e:2x2x1
jax: 0.10.0
libtpu: 0.0.40
codegen_flags: <defaults>
</compile_context>

<pallas_src>
import functools
from typing import NamedTuple

import numpy as np
import jax
import jax.numpy as jnp
from jax.experimental import pallas as pl
from jax.experimental.pallas import tpu as pltpu


def _round_up(x, m):
    return ((x + m - 1) // m) * m


def _dot(a, b):
    return jax.lax.dot_general(a, b, (((1,), (0,)), ((), ())),
                               preferred_element_type=jnp.float32)


# --------------------------------------------------------------------------- #
# pltpu.roll capability / direction probe (run once per backend).             #
# --------------------------------------------------------------------------- #
_ROLL_TRAITS_CACHE = {}


def _roll_traits():
    """Detect direction / availability of plain, dynamic and strided rolls."""
    backend = jax.default_backend()
    if backend in _ROLL_TRAITS_CACHE:
        return _ROLL_TRAITS_CACHE[backend]

    base = np.tile(np.arange(128, dtype=np.float32), (8, 1))

    def run(kind):
        def kern(s_ref, x_ref, o_ref):
            if kind == "static":
                o_ref[...] = pltpu.roll(x_ref[...], 1, axis=1)
            elif kind == "dynamic":
                o_ref[...] = pltpu.roll(x_ref[...], s_ref[0], axis=1)
            else:  # strided; row amounts 126..133 also exercise the >=width wrap
                o_ref[...] = pltpu.roll(x_ref[...], 126, axis=1,
                                        stride=1, stride_axis=0)

        out = pl.pallas_call(
            kern,
            out_shape=jax.ShapeDtypeStruct((8, 128), jnp.float32),
            in_specs=[pl.BlockSpec(memory_space=pltpu.MemorySpace.SMEM),
                      pl.BlockSpec(memory_space=pltpu.MemorySpace.VMEM)],
        )(jnp.array([1], dtype=jnp.int32), jnp.asarray(base))
        return np.asarray(jax.block_until_ready(out))

    def matches(arr, amounts):
        exp = np.stack([np.roll(base[r], a) for r, a in enumerate(amounts)])
        return np.array_equal(arr, exp)

    traits = {"static_higher": True, "dyn_ok": False, "dyn_higher": True,
              "strided_jnp": False}

    st = run("static")                       # plain static roll is required
    if matches(st, [1] * 8):
        traits["static_higher"] = True
    elif matches(st, [-1] * 8):
        traits["static_higher"] = False
    else:
        raise RuntimeError("unexpected pltpu.roll semantics on this backend")

    try:
        dy = run("dynamic")
        if matches(dy, [1] * 8):
            traits.update(dyn_ok=True, dyn_higher=True)
        elif matches(dy, [-1] * 8):
            traits.update(dyn_ok=True, dyn_higher=False)
    except Exception:
        pass

    try:
        tr = run("strided")
        traits["strided_jnp"] = matches(tr, [126 + r for r in range(8)])
    except Exception:
        pass

    _ROLL_TRAITS_CACHE[backend] = traits
    return traits


# --------------------------------------------------------------------------- #
# kernels                                                                     #
# --------------------------------------------------------------------------- #
def _strided_kernel(q_ref, e_ref, o_ref, *, Sp, k_step, base_dev, stride_dev,
                    nt, dyn_higher, compute_dtype):
    """Fused scores + skew (single strided roll) + causal mask.

    q_ref : (B, 1, bt, D) f32,  e_ref : (1, D, Sp),  o_ref : (B, 1, bt, Sp).
    """
    B, _, bt, D = q_ref.shape
    e = e_ref[0]                                            # (D, Sp)
    t0 = pl.program_id(1) * bt

    # causal keep mask (same pattern for every batch element)
    r = jax.lax.broadcasted_iota(jnp.int32, (bt, 1), 0)
    keep_len = k_step * (t0 + r + 1)
    col = jax.lax.broadcasted_iota(jnp.int32, (bt, Sp), 1)
    keep = col < keep_len

    if nt > 1:                                  # per-tile uniform base offset
        extra = k_step * t0                     # strictly < Sp by construction
        if not dyn_higher:
            extra = jnp.where(extra == 0, 0, Sp - extra)

    folded = (B == 1) or (bt % 8 == 0)
    if folded:                                  # one big-M matmul for all B
        q2 = q_ref[...].reshape(B * bt, D).astype(compute_dtype)
        s_all = _dot(q2, e)                     # (B*bt, Sp) f32
        if nt > 1:
            s_all = pltpu.roll(s_all, extra, axis=1)

    for b in range(B):
        if folded:
            sb = s_all[b * bt:(b + 1) * bt] if B > 1 else s_all
        else:
            sb = _dot(q_ref[b, 0].astype(compute_dtype), e)
            if nt > 1:
                sb = pltpu.roll(sb, extra, axis=1)
        # the whole "skew": one strided lane rotation (amount = base + r*stride)
        sb = pltpu.roll(sb, base_dev, axis=1, stride=stride_dev, stride_axis=0)
        o_ref[b, 0] = jnp.where(keep, sb, 0.0).astype(o_ref.dtype)


def _ladder_kernel(amt_ref, q_ref, e_ref, o_ref, *, S, Sp, n_bits, dir_higher,
                   compute_dtype):
    """Fallback skew via log2 conditional rolls (upsampling / no strided roll).

    amt_ref : (bt, 1) int32 per-row roll amount in the device convention.
    """
    B, _, bt, D = q_ref.shape
    e = e_ref[0]
    amt = amt_ref[...]                                      # (bt, 1)

    if dir_higher:
        shift_left = jnp.where(amt == 0, 0, Sp - amt)
    else:
        shift_left = amt
    col = jax.lax.broadcasted_iota(jnp.int32, (bt, Sp), 1)
    keep = col < (S - shift_left)

    def skew(scores, amounts):
        out = scores
        for kb in range(n_bits):
            p = 1 << kb
            rolled = pltpu.roll(out, p, axis=1)
            out = jnp.where((amounts & p) != 0, rolled, out)
        return out

    folded = (B == 1) or (bt % 8 == 0)
    if folded:
        q2 = q_ref[...].reshape(B * bt, D).astype(compute_dtype)
        s = _dot(q2, e)                                     # (B*bt, Sp)
        amt_full = amt if B == 1 else jnp.concatenate([amt] * B, axis=0)
        s = skew(s, amt_full)                               # rolls shared over B
        for b in range(B):
            sb = s[b * bt:(b + 1) * bt] if B > 1 else s
            o_ref[b, 0] = jnp.where(keep, sb, 0.0).astype(o_ref.dtype)
    else:
        for b in range(B):
            sb = skew(_dot(q_ref[b, 0].astype(compute_dtype), e), amt)
            o_ref[b, 0] = jnp.where(keep, sb, 0.0).astype(o_ref.dtype)


# --------------------------------------------------------------------------- #
# wrapper glue                                                                #
# --------------------------------------------------------------------------- #
def _vmem_params():
    """Generation-aware VMEM budgets (v5e/v6e: 128 MiB, v7x: 64 MiB)."""
    try:
        cap = int(pltpu.get_tpu_info().vmem_capacity_bytes)
    except Exception:
        cap = 64 * 1024 * 1024
    budget = int(min(cap // 4, 24 * 1024 * 1024))       # pipelined working set
    limit = int(min(cap // 2, 64 * 1024 * 1024))        # scoped vmem limit
    return budget, limit


def _choose_block_t(T, B, D, Sp, e_bytes, out_bytes, align, budget,
                    max_block_t=0):
    """Largest row tile (multiple of `align`, or the full axis) whose VMEM
    footprint — double-buffered q / e / out blocks plus f32 intermediates —
    fits inside `budget`."""
    if T <= align:
        return T
    per_row = (2 * B * D * 4                       # q block (f32), x2 buffers
               + 2 * B * Sp * out_bytes            # out block, x2 buffers
               + B * (3 * Sp * 4 + 6 * D))         # scores + rolled + casts
    fixed = 2 * D * Sp * e_bytes + (256 << 10)
    avail = max(budget - fixed, per_row * align)
    bt = max(align, (avail // per_row) // align * align)
    cap = T
    if max_block_t > 0:
        cap = max(align, min(T, max_block_t) // align * align)
    bt = min(bt, cap)
    return T if bt >= T else bt


class _Cfg(NamedTuple):
    mode: str
    ratio: int
    S: int
    T: int
    Sp: int
    k_step: int
    base_dev: int
    stride_dev: int
    strided_ok: bool
    dyn_ok: bool
    dyn_higher: bool
    ladder_higher: bool
    n_bits: int
    compute_dtype: str
    out_dtype: str
    budget: int
    vmem_limit: int
    max_block_t: int


@functools.partial(jax.jit, static_argnames=("cfg",))
def _forward(q, e_t, amt, cfg):
    B, H, T, D = q.shape
    S, Sp = cfg.S, cfg.Sp
    cdt = jnp.dtype(cfg.compute_dtype)
    odt = jnp.dtype(cfg.out_dtype)

    block_t = _choose_block_t(T, B, D, Sp, e_bytes=cdt.itemsize,
                              out_bytes=odt.itemsize, align=8,
                              budget=cfg.budget, max_block_t=cfg.max_block_t)
    nt = pl.cdiv(T, block_t)
    use_strided = (cfg.strided_ok and cfg.mode != "upsampling"
                   and (nt == 1 or cfg.dyn_ok))

    grid = (H, nt)
    q_spec = pl.BlockSpec((B, 1, block_t, D), lambda h, i: (0, h, i, 0))
    e_spec = pl.BlockSpec((1, D, Sp), lambda h, i: (h, 0, 0))
    o_spec = pl.BlockSpec((B, 1, block_t, Sp), lambda h, i: (0, h, i, 0))
    out_shape = jax.ShapeDtypeStruct((B, H, T, Sp), odt)   # lane-dense output
    cparams = pltpu.CompilerParams(
        dimension_semantics=("parallel", "parallel"),
        vmem_limit_bytes=cfg.vmem_limit,
    )

    if use_strided:
        kern = functools.partial(
            _strided_kernel, Sp=Sp, k_step=cfg.k_step, base_dev=cfg.base_dev,
            stride_dev=cfg.stride_dev, nt=int(nt), dyn_higher=cfg.dyn_higher,
            compute_dtype=cdt)
        out = pl.pallas_call(kern, out_shape=out_shape, grid=grid,
                             in_specs=[q_spec, e_spec], out_specs=o_spec,
                             compiler_params=cparams)(q, e_t)
    else:
        kern = functools.partial(
            _ladder_kernel, S=S, Sp=Sp, n_bits=cfg.n_bits,
            dir_higher=cfg.ladder_higher, compute_dtype=cdt)
        amt_spec = pl.BlockSpec((block_t, 1), lambda h, i: (i, 0))
        out = pl.pallas_call(kern, out_shape=out_shape, grid=grid,
                             in_specs=[amt_spec, q_spec, e_spec],
                             out_specs=o_spec,
                             compiler_params=cparams)(amt, q, e_t)

    if Sp != S:          # free XLA slice; kernel stores are unmasked, 128-wide
        out = out[..., :S]
    return out


class SubsampledRelativeAttention:
    """JAX/Pallas port of the PyTorch SubsampledRelativeAttention module."""

    def __init__(self, head_dim, num_heads, seq_len_src, seq_len_tgt, key,
                 compute_dtype=jnp.bfloat16, out_dtype=jnp.float32,
                 max_block_t=0):
        self.head_dim = head_dim
        self.num_heads = num_heads
        self.seq_len_src = seq_len_src
        self.seq_len_tgt = seq_len_tgt

        if seq_len_src > seq_len_tgt:
            self.mode = "downsampling"
            self.subsampling_ratio = seq_len_src // seq_len_tgt
            assert self.subsampling_ratio * seq_len_tgt == seq_len_src
            m = seq_len_tgt
        elif seq_len_src < seq_len_tgt:
            self.mode = "upsampling"
            self.subsampling_ratio = seq_len_tgt // seq_len_src
            assert self.subsampling_ratio * seq_len_src == seq_len_tgt
            m = seq_len_src
        else:
            self.mode = "fix"
            self.subsampling_ratio = 1
            m = seq_len_src

        # parameter (same role as nn.Parameter(torch.randn(...)))
        self.e = jax.random.normal(key, (num_heads, m, head_dim), jnp.float32)

        S, T = seq_len_src, seq_len_tgt
        ratio = self.subsampling_ratio
        Sp = _round_up(S, 128)                     # lane-dense compute width

        # ---- pre-transposed, lane-padded relative embedding (H, D, Sp) ----
        e_eff = self.e
        if self.mode == "downsampling":
            # fold the torch repeat_interleave of the wide activation into the
            # tiny weight instead (no wide HBM intermediate)
            e_eff = jnp.repeat(e_eff, ratio, axis=1)          # (H, S, D)
        e_t = jnp.transpose(e_eff, (0, 2, 1))                 # (H, D, S)
        if Sp != S:
            e_t = jnp.pad(e_t, ((0, 0), (0, 0), (0, Sp - S)))
        self._e_t = e_t.astype(compute_dtype)

        traits = _roll_traits()

        # ---- static skew arithmetic (host side, tiny) ----
        t = np.arange(T, dtype=np.int64)
        if self.mode == "downsampling":
            shift_left = ratio * (T - 1 - t)
            k_step = ratio
        elif self.mode == "upsampling":
            shift_left = (S - 1) - t // ratio
            k_step = 1
        else:
            shift_left = (T - 1) - t
            k_step = 1

        # per-row roll amounts for the select-ladder fallback (device conv.)
        if traits["static_higher"]:
            amt = np.where(shift_left == 0, 0, Sp - shift_left)
        else:
            amt = shift_left
        self._amt = jnp.asarray(amt.reshape(T, 1).astype(np.int32))
        n_bits = int(amt.max()).bit_length() if T > 0 else 0

        # single strided-roll parameters (only used when pltpu.roll matches
        # jnp.roll semantics; otherwise the ladder fallback is used)
        C = (Sp - k_step * (T - 1)) % Sp
        if traits["strided_jnp"]:
            base_dev, stride_dev, strided_ok = int(C), int(k_step), True
        else:
            base_dev, stride_dev, strided_ok = 0, 1, False

        budget, vmem_limit = _vmem_params()
        self._cfg = _Cfg(
            mode=self.mode, ratio=int(ratio), S=int(S), T=int(T), Sp=int(Sp),
            k_step=int(k_step), base_dev=base_dev, stride_dev=stride_dev,
            strided_ok=strided_ok, dyn_ok=bool(traits["dyn_ok"]),
            dyn_higher=bool(traits["dyn_higher"]),
            ladder_higher=bool(traits["static_higher"]), n_bits=int(n_bits),
            compute_dtype=jnp.dtype(compute_dtype).name,
            out_dtype=jnp.dtype(out_dtype).name,
            budget=budget, vmem_limit=vmem_limit, max_block_t=int(max_block_t))

    def __call__(self, q):
        B, H, T, D = q.shape
        assert (H, T, D) == (self.num_heads, self.seq_len_tgt, self.head_dim)
        return _forward(q, self._e_t, self._amt, cfg=self._cfg)


# --------------- faithful pure-JAX port of the torch forward ----------------
# (independent of the kernel's index arithmetic; used only for validation)
def reference_forward(q, e, seq_len_src, seq_len_tgt, mode, ratio, compute_dtype):
    B, H, L, D = q.shape
    b_h = B * H
    rel = jnp.einsum(
        "bhld,hmd->bhlm",
        q.astype(compute_dtype), e.astype(compute_dtype),
        preferred_element_type=jnp.float32)
    if mode == "upsampling":
        len_src, len_tgt = seq_len_src, seq_len_tgt
    else:
        len_src, len_tgt = seq_len_tgt, seq_len_tgt
    rel = rel.reshape(b_h, len_src, len_tgt)
    rel = jnp.concatenate(
        [jnp.full((b_h, len_src, 1), -100.0, rel.dtype), rel], axis=2)
    bottom = len_tgt - len_src
    if bottom != 0:
        rel = jnp.concatenate(
            [rel, jnp.full((b_h, bottom, len_tgt + 1), -100.0, rel.dtype)],
            axis=1)
    rel = rel.reshape(b_h, -1, len_src)
    rel = rel[:, 1:]
    rel = rel[:, :len_tgt, :]
    if mode == "downsampling":
        rel = jnp.repeat(rel, ratio, axis=-1)
    masks = jnp.triu(jnp.ones((len_src, len_src), dtype=bool), k=1)
    if mode == "upsampling":
        masks = jnp.repeat(masks, ratio, axis=0)
    elif mode == "downsampling":
        masks = jnp.repeat(masks, ratio, axis=1)
    rel = jnp.where(masks[None], jnp.zeros((), rel.dtype), rel)
    return rel.reshape(B, H, seq_len_tgt, seq_len_src)


# ----------------------------------- main -----------------------------------
if __name__ == "__main__":
    B, H, D = 2, 4, 32
    key = jax.random.PRNGKey(0)

    # (expected mode, seq_len_src, seq_len_tgt, forced max block_t)
    configs = [
        ("fix",          16,  16, 0),
        ("downsampling", 32,  16, 0),
        ("upsampling",    8,  16, 0),
        ("fix",         128, 128, 0),    # lane-dense, un-padded output path
        ("fix",          24,  24, 16),   # multi-tile grid + ragged last tile
        ("downsampling", 64,  32, 16),   # multi-tile grid + dynamic base roll
    ]

    for name, src, tgt, mbt in configs:
        key, kq, ke = jax.random.split(key, 3)
        mod = SubsampledRelativeAttention(D, H, src, tgt, ke, max_block_t=mbt)
        assert mod.mode == name, (mod.mode, name)
        q = jax.random.normal(kq, (B, H, tgt, D), jnp.float32)

        out = jax.block_until_ready(mod(q))
        assert out.shape == (B, H, tgt, src), (name, out.shape)

        ref = jax.block_until_ready(
            reference_forward(q, mod.e, src, tgt, mod.mode,
                              mod.subsampling_ratio, jnp.bfloat16))
        if not bool(jnp.allclose(out, ref, atol=5e-2, rtol=5e-2)):
            max_err = float(jnp.max(jnp.abs(out - ref)))
            raise AssertionError(
                f"mismatch in mode {name} ({src}->{tgt}): max|err|={max_err}")

    print("KERNEL_OK")
</pallas_src>

<mosaic_0001>
module attributes {stable_mosaic.version = 11 : i64} {
  func.func @kern(%arg0: memref<1xi32, #tpu.memory_space<smem>>, %arg1: memref<8x128xf32, #tpu.memory_space<vmem>>, %arg2: memref<8x128xf32, #tpu.memory_space<vmem>>) attributes {dimension_semantics = [], scalar_prefetch = 0 : i64, scratch_operands = 0 : i64, tpu.core_type = #tpu.core_type<tc>} {
    %c0 = arith.constant 0 : index
    %c0_0 = arith.constant 0 : index
    %0 = vector.load %arg1[%c0, %c0_0] : memref<8x128xf32, #tpu.memory_space<vmem>>, vector<8x128xf32>
    %c1_i32 = arith.constant 1 : i32
    %1 = tpu.dynamic_rotate %0 by %c1_i32 dim 1 : vector<8x128xf32>, i32 -> vector<8x128xf32>
    %c0_1 = arith.constant 0 : index
    %c0_2 = arith.constant 0 : index
    %2 = vector.load %arg2[%c0_1, %c0_2] : memref<8x128xf32, #tpu.memory_space<vmem>>, vector<8x128xf32>
    tpu.vector_store %arg2[%c0_1, %c0_2], %1 {strides = array<i32>} : memref<8x128xf32, #tpu.memory_space<vmem>>, vector<8x128xf32>,
    return
  }
}

</mosaic_0001>

<llo_original>
// kernel: tpu_custom_call.1
$region0: #{tpu_custom_call.1}
  #allocation0 [shape = 'u32[]', space=smem, size = 0x4, offset = 0x4, fixed_abs, tag = 'smem constant byte address 0x4 - core index']
  #allocation1 [shape = 'u32[144,128]{1,0:T(1,128)}', space=vmem, size = 0x12000, scoped, tag = 'internal scratch']
  #allocation2 [shape = 's32[1]{0:T(128)S(6)}', space=smem, size = 0x200, scoped, tag = 'scoped memory for tpu_custom_call.1']
  %s0 = inlined_call_operand.<no memory space> [shape: s32[1], index: 0, kind: input, shape index: {}]
  %s1 = inlined_call_operand.hbm [shape: f32[8,128], index: 1, kind: input, shape index: {}]
  %s2 = inlined_call_operand.hbm [shape: f32[8,128], index: 2, kind: output, shape index: {}]
  %s3 = sld [smem:[#allocation0]]
  $region22: #{tpu_custom_call.1} parent=0
    _
  %s5 = ssub.s32 1, %s3
  %s6 = scalar_select 0, %s5, %s3
  %7 = sst [smem:[#allocation2]] %s0
  $region1: #{tpu_custom_call.1} parent=0
    #allocation3 [shape = 'u8[4096]{0}', space=vmem, size = 0x1000, scoped, tag = 'input window, operand 1, single buffered']
    #allocation4 [shape = 's32[1]{0}', space=sflag, size = 0x4, scoped, tag = 'scoped memory for tpu_custom_call.1']
    #allocation5 [shape = 's32[1]{0}', space=sflag, size = 0x4, scoped, tag = 'scoped memory for tpu_custom_call.1']
    #allocation6 [shape = 'u8[4096]{0}', space=vmem, size = 0x1000, scoped, tag = 'output window, operand 0, single buffered']
    %8 = vsyncpa [#allocation4], 0
    %9 = vsyncpa [#allocation5], 0
    // Predicated region
    $region2: #{tpu_custom_call.1} parent=1 // pred_check
      _
    $region3: #{tpu_custom_call.1} parent=1 // pred_check_branch
      %11 = sbr.rel (0) target = $region5
    $region4: #{tpu_custom_call.1} parent=1 // pred_region
      _
    $region5: #{tpu_custom_call.1} parent=1 // pred_fallthru
      _
    // Predicated region
    $region6: #{tpu_custom_call.1} parent=1 // pred_check
      _
    $region7: #{tpu_custom_call.1} parent=1 // pred_check_branch
      %13 = sbr.rel (0) target = $region9
    $region8: #{tpu_custom_call.1} parent=1 // pred_region
      %s15 = ssub.s32 128, 128
      %16 = vsyncadd [#allocation4], %s15
      %s18 = sshll.u32 [#allocation3], 4
      %s19 = int_to_ptr.vmem [resolvable:$true] %s18
      %21 = dma.hbm_to_vmem [thread:$0]  %s1, 128, %s19, [#allocation4]
    $region9: #{tpu_custom_call.1} parent=1 // pred_fallthru
      _
    // Predicated region
    $region10: #{tpu_custom_call.1} parent=1 // pred_check
      _
    $region11: #{tpu_custom_call.1} parent=1 // pred_check_branch
      %23 = sbr.rel (0) target = $region13
    $region12: #{tpu_custom_call.1} parent=1 // pred_region
      %24 = dma.done [#allocation4], 128
    $region13: #{tpu_custom_call.1} parent=1 // pred_fallthru
      _
    %v25 = vld [vmem:[#allocation3] sm:$0xff]
    %26 = vrot.lane.b32.xlu0 %v25, 1
    %v27 = vpop.permute.xlu0 %26
    %28 = vst [vmem:[#allocation6] sm:$0xff] %v27
    // Predicated region
    $region14: #{tpu_custom_call.1} parent=1 // pred_check
      _
    $region15: #{tpu_custom_call.1} parent=1 // pred_check_branch
      %30 = sbr.rel (0) target = $region17
    $region16: #{tpu_custom_call.1} parent=1 // pred_region
      %s32 = ssub.s32 128, 128
      %33 = vsyncadd [#allocation5], %s32
      %s35 = sshll.u32 [#allocation6], 4
      %s36 = int_to_ptr.vmem [resolvable:$true] %s35
      %38 = dma.vmem_to_hbm [thread:$0]  %s36, 128, %s2, [#allocation5]
    $region17: #{tpu_custom_call.1} parent=1 // pred_fallthru
      _
    // Predicated region
    $region18: #{tpu_custom_call.1} parent=1 // pred_check
      _
    $region19: #{tpu_custom_call.1} parent=1 // pred_check_branch
      %40 = sbr.rel (0) target = $region21
    $region20: #{tpu_custom_call.1} parent=1 // pred_region
      %41 = dma.done [#allocation5], 128
    $region21: #{tpu_custom_call.1} parent=1 // pred_fallthru
      _
    %42 = vsyncpa [#allocation4], 1
    %43 = vsyncpa [#allocation5], 1

</llo_original>
